<compile_context>
chip_gen: v6e
topology: v6e:2x2x1
jax: 0.10.0
libtpu: 0.0.40
codegen_flags: <defaults>
</compile_context>

<pallas_src>
import functools

import jax
import jax.numpy as jnp
from jax.experimental import pallas as pl
from jax.experimental.pallas import tpu as pltpu


def _fused_lstm_classifier_kernel(num_layers, hidden_size, *refs):
    """Fused forward, grid=(), everything VMEM-resident.

    Ref layout:
      refs[0]          : x      (B, input_size)           f32
      refs[1 + l]      : w_l    (Din_l, 3H)               bf16   (i, g, o columns only)
      refs[1 + L]      : b_all  (L, 3H)                   f32    (b_ih + b_hh, i/g/o only)
      refs[2 + L]      : w_fc_t (H, C_pad)                bf16   (C padded to 128 lanes)
      refs[3 + L]      : b_fc   (1, C_pad)                f32    (-1e30 on padded columns)
      refs[4 + L]      : out    (B, C_pad)                f32
    """
    H, L = hidden_size, num_layers
    x_ref = refs[0]
    b_all = refs[1 + L][...]          # (L, 3H) f32
    w_fc = refs[2 + L][...]           # (H, C_pad) bf16
    b_fc = refs[3 + L][...]           # (1, C_pad) f32
    out_ref = refs[4 + L]

    h = x_ref[...]                    # (B, Din) f32; stays in vregs across layers
    for l in range(L):                # static unroll over layers
        w = refs[1 + l][...]          # (Din_l, 3H) bf16
        gates = jnp.dot(h.astype(jnp.bfloat16), w,
                        preferred_element_type=jnp.float32)
        gates = gates + b_all[l:l + 1, :]
        # Gate layout after f-gate drop: [i | g | o].
        # At production sizes H should be a multiple of 128 so these slices are lane-aligned.
        i = jax.nn.sigmoid(gates[:, 0:H])
        g = jnp.tanh(gates[:, H:2 * H])
        o = jax.nn.sigmoid(gates[:, 2 * H:3 * H])
        h = o * jnp.tanh(i * g)       # c = i * g (f * c0 == 0 dropped)

    logits = jnp.dot(h.astype(jnp.bfloat16), w_fc,
                     preferred_element_type=jnp.float32) + b_fc
    m = jnp.max(logits, axis=-1, keepdims=True)
    e = jnp.exp(logits - m)           # padded cols: exp(-1e30 - m) == 0, don't pollute the sum
    out_ref[...] = e / jnp.sum(e, axis=-1, keepdims=True)   # exact division (review fix)


def lstm_classifier_forward(x, params, *, hidden_size, num_layers, num_classes):
    """Pallas equivalent of LSTMClassifier.forward.

    x: (N, input_size)  (PyTorch x.view(-1, 1, input_size) => seq_len 1, batch N).
    """
    B, _ = x.shape
    inputs = [x.astype(jnp.float32)]
    inputs += list(params["lstm_w"])          # L x (Din_l, 3H) bf16
    inputs += [params["b_all"], params["fc_w"], params["fc_b"]]
    c_pad = params["fc_w"].shape[1]

    kernel = functools.partial(_fused_lstm_classifier_kernel, num_layers, hidden_size)
    out = pl.pallas_call(
        kernel,
        out_shape=jax.ShapeDtypeStruct((B, c_pad), jnp.float32),
        in_specs=[pl.BlockSpec(memory_space=pltpu.MemorySpace.VMEM) for _ in inputs],
        out_specs=pl.BlockSpec(memory_space=pltpu.MemorySpace.VMEM),
        compiler_params=pltpu.CompilerParams(vmem_limit_bytes=32 * 1024 * 1024),
    )(*inputs)
    return out[:, :num_classes]


def init_params(key, input_size, hidden_size, num_layers, num_classes):
    """PyTorch-style init (uniform(-k, k), k = 1/sqrt(H)), stored in the kernel's layout:
    f-gate columns dropped, weights pre-transposed + bf16, biases pre-summed + stacked,
    fc1 padded to a lane-dense 128-wide output."""
    H = hidden_size
    k = 1.0 / float(H) ** 0.5
    keep = jnp.concatenate([jnp.arange(0, H),            # i
                            jnp.arange(2 * H, 4 * H)])   # g, o  (f rows dropped)
    lstm_w, lstm_b = [], []
    for layer in range(num_layers):
        d_in = input_size if layer == 0 else H
        key, k1, k2, k3, k4 = jax.random.split(key, 5)
        w_ih = jax.random.uniform(k1, (4 * H, d_in), jnp.float32, -k, k)
        # nn.LSTM has w_hh, but with seq_len == 1 and h0 == 0 it never affects the output,
        # so it is drawn (parameterization fidelity) and never shipped to the kernel.
        _w_hh = jax.random.uniform(k2, (4 * H, H), jnp.float32, -k, k)
        b_ih = jax.random.uniform(k3, (4 * H,), jnp.float32, -k, k)
        b_hh = jax.random.uniform(k4, (4 * H,), jnp.float32, -k, k)
        lstm_w.append(jnp.asarray(w_ih[keep, :].T, jnp.bfloat16))   # (d_in, 3H) bf16
        lstm_b.append((b_ih + b_hh)[keep])                           # (3H,) f32
    b_all = jnp.stack(lstm_b, axis=0)                                # (L, 3H) f32

    key, k1, k2 = jax.random.split(key, 3)
    w_fc = jax.random.uniform(k1, (num_classes, H), jnp.float32, -k, k)
    b_fc = jax.random.uniform(k2, (num_classes,), jnp.float32, -k, k)
    c_pad = max(128, pl.cdiv(num_classes, 128) * 128)
    w_fc_t = jnp.zeros((H, c_pad), jnp.float32).at[:, :num_classes].set(w_fc.T)
    b_fc_p = jnp.full((1, c_pad), -1e30, jnp.float32).at[0, :num_classes].set(b_fc)
    return {
        "lstm_w": tuple(lstm_w),
        "b_all": b_all,
        "fc_w": jnp.asarray(w_fc_t, jnp.bfloat16),
        "fc_b": b_fc_p,
    }


def _reference_forward(x, params, num_classes):
    """Pure-JAX reference with identical math (bf16 matmul inputs, f32 accumulation,
    exact softmax) on the unpadded fc1 columns."""
    h = x.astype(jnp.float32)
    b_all = params["b_all"]
    for layer, w in enumerate(params["lstm_w"]):
        H = w.shape[1] // 3
        gates = jnp.dot(h.astype(jnp.bfloat16), w,
                        preferred_element_type=jnp.float32) + b_all[layer]
        i = jax.nn.sigmoid(gates[:, 0:H])
        g = jnp.tanh(gates[:, H:2 * H])
        o = jax.nn.sigmoid(gates[:, 2 * H:3 * H])
        h = o * jnp.tanh(i * g)
    w_fc = params["fc_w"][:, :num_classes]
    b_fc = params["fc_b"][:, :num_classes]
    logits = jnp.dot(h.astype(jnp.bfloat16), w_fc,
                     preferred_element_type=jnp.float32) + b_fc
    return jax.nn.softmax(logits, axis=-1)


if __name__ == "__main__":
    input_size = 16
    hidden_size = 32
    num_layers = 2
    num_classes = 4
    batch = 2

    key = jax.random.PRNGKey(0)
    key, kx = jax.random.split(key)
    # x as it looks after x.view(-1, 1, input_size): (batch, input_size), seq_len == 1.
    x = jax.random.normal(kx, (batch, input_size), jnp.float32)
    params = init_params(key, input_size, hidden_size, num_layers, num_classes)

    fwd = jax.jit(functools.partial(
        lstm_classifier_forward, hidden_size=hidden_size,
        num_layers=num_layers, num_classes=num_classes))
    out = jax.block_until_ready(fwd(x, params))

    assert out.shape == (batch, num_classes)
    # Exact softmax division -> rows sum to 1 up to f32 rounding.
    assert bool(jnp.allclose(jnp.sum(out, axis=1), 1.0, atol=1e-5))
    # Match the pure-JAX reference (same bf16-weight / f32-accum math).
    ref = _reference_forward(x, params, num_classes)
    assert bool(jnp.allclose(out, ref, atol=2e-3)), (out, ref)
    print("KERNEL_OK")
</pallas_src>

<mosaic_0001>
module attributes {stable_mosaic.version = 11 : i64} {
  func.func @_fused_lstm_classifier_kernel(%arg0: memref<2x16xf32, #tpu.memory_space<vmem>>, %arg1: memref<16x96xbf16, #tpu.memory_space<vmem>>, %arg2: memref<32x96xbf16, #tpu.memory_space<vmem>>, %arg3: memref<2x96xf32, #tpu.memory_space<vmem>>, %arg4: memref<32x128xbf16, #tpu.memory_space<vmem>>, %arg5: memref<1x128xf32, #tpu.memory_space<vmem>>, %arg6: memref<2x128xf32, #tpu.memory_space<vmem>>) attributes {dimension_semantics = [], scalar_prefetch = 0 : i64, scratch_operands = 0 : i64, tpu.core_type = #tpu.core_type<tc>} {
    %c0 = arith.constant 0 : index
    %c0_0 = arith.constant 0 : index
    %0 = vector.load %arg3[%c0, %c0_0] : memref<2x96xf32, #tpu.memory_space<vmem>>, vector<2x96xf32>
    %c0_1 = arith.constant 0 : index
    %c0_2 = arith.constant 0 : index
    %1 = vector.load %arg4[%c0_1, %c0_2] : memref<32x128xbf16, #tpu.memory_space<vmem>>, vector<32x128xbf16>
    %c0_3 = arith.constant 0 : index
    %c0_4 = arith.constant 0 : index
    %2 = vector.load %arg5[%c0_3, %c0_4] : memref<1x128xf32, #tpu.memory_space<vmem>>, vector<1x128xf32>
    %c0_5 = arith.constant 0 : index
    %c0_6 = arith.constant 0 : index
    %3 = vector.load %arg0[%c0_5, %c0_6] : memref<2x16xf32, #tpu.memory_space<vmem>>, vector<2x16xf32>
    %c0_7 = arith.constant 0 : index
    %c0_8 = arith.constant 0 : index
    %4 = vector.load %arg1[%c0_7, %c0_8] : memref<16x96xbf16, #tpu.memory_space<vmem>>, vector<16x96xbf16>
    %5 = arith.truncf %3 : vector<2x16xf32> to vector<2x16xbf16>
    %cst = arith.constant dense<0.000000e+00> : vector<2x96xf32>
    %6 = tpu.matmul %5, %4, %cst {dimension_numbers = #tpu.dot_dimension_numbers<[1], [0], [0], [1], [0, 0, 1, 1], [], []>} : vector<2x16xbf16>, vector<16x96xbf16>, vector<2x96xf32> -> vector<2x96xf32>
    %7 = vector.extract_strided_slice %0 {offsets = [0, 0], sizes = [1, 96], strides = [1, 1]} : vector<2x96xf32> to vector<1x96xf32>
    %8 = vector.broadcast %7 : vector<1x96xf32> to vector<2x96xf32>
    %9 = arith.addf %6, %8 : vector<2x96xf32>
    %10 = vector.extract_strided_slice %9 {offsets = [0, 0], sizes = [2, 32], strides = [1, 1]} : vector<2x96xf32> to vector<2x32xf32>
    %11 = arith.negf %10 : vector<2x32xf32>
    %12 = math.exp %11 : vector<2x32xf32>
    %cst_9 = arith.constant 1.000000e+00 : f32
    %13 = vector.broadcast %cst_9 : f32 to vector<2x32xf32>
    %14 = arith.addf %13, %12 : vector<2x32xf32>
    %15 = arith.divf %13, %14 : vector<2x32xf32>
    %16 = vector.extract_strided_slice %9 {offsets = [0, 32], sizes = [2, 32], strides = [1, 1]} : vector<2x96xf32> to vector<2x32xf32>
    %17 = math.tanh %16 : vector<2x32xf32>
    %18 = vector.extract_strided_slice %9 {offsets = [0, 64], sizes = [2, 32], strides = [1, 1]} : vector<2x96xf32> to vector<2x32xf32>
    %19 = arith.negf %18 : vector<2x32xf32>
    %20 = math.exp %19 : vector<2x32xf32>
    %cst_10 = arith.constant 1.000000e+00 : f32
    %21 = vector.broadcast %cst_10 : f32 to vector<2x32xf32>
    %22 = arith.addf %21, %20 : vector<2x32xf32>
    %23 = arith.divf %21, %22 : vector<2x32xf32>
    %24 = arith.mulf %15, %17 : vector<2x32xf32>
    %25 = math.tanh %24 : vector<2x32xf32>
    %26 = arith.mulf %23, %25 : vector<2x32xf32>
    %c0_11 = arith.constant 0 : index
    %c0_12 = arith.constant 0 : index
    %27 = vector.load %arg2[%c0_11, %c0_12] : memref<32x96xbf16, #tpu.memory_space<vmem>>, vector<32x96xbf16>
    %28 = arith.truncf %26 : vector<2x32xf32> to vector<2x32xbf16>
    %cst_13 = arith.constant dense<0.000000e+00> : vector<2x96xf32>
    %29 = tpu.matmul %28, %27, %cst_13 {dimension_numbers = #tpu.dot_dimension_numbers<[1], [0], [0], [1], [0, 0, 1, 1], [], []>} : vector<2x32xbf16>, vector<32x96xbf16>, vector<2x96xf32> -> vector<2x96xf32>
    %30 = vector.extract_strided_slice %0 {offsets = [1, 0], sizes = [1, 96], strides = [1, 1]} : vector<2x96xf32> to vector<1x96xf32>
    %31 = vector.broadcast %30 : vector<1x96xf32> to vector<2x96xf32>
    %32 = arith.addf %29, %31 : vector<2x96xf32>
    %33 = vector.extract_strided_slice %32 {offsets = [0, 0], sizes = [2, 32], strides = [1, 1]} : vector<2x96xf32> to vector<2x32xf32>
    %34 = arith.negf %33 : vector<2x32xf32>
    %35 = math.exp %34 : vector<2x32xf32>
    %cst_14 = arith.constant 1.000000e+00 : f32
    %36 = vector.broadcast %cst_14 : f32 to vector<2x32xf32>
    %37 = arith.addf %36, %35 : vector<2x32xf32>
    %38 = arith.divf %36, %37 : vector<2x32xf32>
    %39 = vector.extract_strided_slice %32 {offsets = [0, 32], sizes = [2, 32], strides = [1, 1]} : vector<2x96xf32> to vector<2x32xf32>
    %40 = math.tanh %39 : vector<2x32xf32>
    %41 = vector.extract_strided_slice %32 {offsets = [0, 64], sizes = [2, 32], strides = [1, 1]} : vector<2x96xf32> to vector<2x32xf32>
    %42 = arith.negf %41 : vector<2x32xf32>
    %43 = math.exp %42 : vector<2x32xf32>
    %cst_15 = arith.constant 1.000000e+00 : f32
    %44 = vector.broadcast %cst_15 : f32 to vector<2x32xf32>
    %45 = arith.addf %44, %43 : vector<2x32xf32>
    %46 = arith.divf %44, %45 : vector<2x32xf32>
    %47 = arith.mulf %38, %40 : vector<2x32xf32>
    %48 = math.tanh %47 : vector<2x32xf32>
    %49 = arith.mulf %46, %48 : vector<2x32xf32>
    %50 = arith.truncf %49 : vector<2x32xf32> to vector<2x32xbf16>
    %cst_16 = arith.constant dense<0.000000e+00> : vector<2x128xf32>
    %51 = tpu.matmul %50, %1, %cst_16 {dimension_numbers = #tpu.dot_dimension_numbers<[1], [0], [0], [1], [0, 0, 1, 1], [], []>} : vector<2x32xbf16>, vector<32x128xbf16>, vector<2x128xf32> -> vector<2x128xf32>
    %52 = vector.broadcast %2 : vector<1x128xf32> to vector<2x128xf32>
    %53 = arith.addf %51, %52 : vector<2x128xf32>
    %cst_17 = arith.constant dense<0xFF800000> : vector<2xf32>
    %54 = vector.multi_reduction <maximumf>, %53, %cst_17 [1] : vector<2x128xf32> to vector<2xf32>
    %55 = vector.shape_cast %54 : vector<2xf32> to vector<2x1xf32>
    %56 = vector.broadcast %55 : vector<2x1xf32> to vector<2x128xf32>
    %57 = arith.subf %53, %56 : vector<2x128xf32>
    %58 = math.exp %57 : vector<2x128xf32>
    %cst_18 = arith.constant dense<0.000000e+00> : vector<2xf32>
    %59 = vector.multi_reduction <add>, %58, %cst_18 [1] : vector<2x128xf32> to vector<2xf32>
    %60 = vector.shape_cast %59 : vector<2xf32> to vector<2x1xf32>
    %61 = vector.broadcast %60 : vector<2x1xf32> to vector<2x128xf32>
    %62 = arith.divf %58, %61 : vector<2x128xf32>
    %c0_19 = arith.constant 0 : index
    %c0_20 = arith.constant 0 : index
    %63 = vector.load %arg6[%c0_19, %c0_20] : memref<2x128xf32, #tpu.memory_space<vmem>>, vector<2x128xf32>
    tpu.vector_store %arg6[%c0_19, %c0_20], %62 {strides = array<i32>} : memref<2x128xf32, #tpu.memory_space<vmem>>, vector<2x128xf32>,
    return
  }
}

</mosaic_0001>

<llo_original>
// kernel: lstm_classifier_forward.1
$region0: #{lstm_classifier_forward.1}
  #allocation0 [shape = 'u32[]', space=smem, size = 0x4, offset = 0x4, fixed_abs, tag = 'smem constant byte address 0x4 - core index']
  #allocation1 [shape = 'u32[144,128]{1,0:T(1,128)}', space=vmem, size = 0x12000, scoped, tag = 'internal scratch']
  %s0 = inlined_call_operand.hbm [shape: f32[2,16], index: 0, kind: input, shape index: {}]
  %s1 = inlined_call_operand.hbm [shape: bf16[16,96], index: 1, kind: input, shape index: {}]
  %s2 = inlined_call_operand.hbm [shape: bf16[32,96], index: 2, kind: input, shape index: {}]
  %s3 = inlined_call_operand.hbm [shape: f32[2,96], index: 3, kind: input, shape index: {}]
  %s4 = inlined_call_operand.hbm [shape: bf16[32,128], index: 4, kind: input, shape index: {}]
  %s5 = inlined_call_operand.vmem [shape: f32[1,128], index: 5, kind: input, shape index: {}]
  %s6 = inlined_call_operand.hbm [shape: f32[2,128], index: 6, kind: output, shape index: {}]
  %s7 = sld [smem:[#allocation0]]
  $region54: #{lstm_classifier_forward.1} parent=0
    _
  %s9 = ssub.s32 1, %s7
  %s10 = scalar_select 0, %s9, %s7
  $region1: #{lstm_classifier_forward.1} parent=0
    #allocation2 [shape = 'u8[1024]{0}', space=vmem, size = 0x400, scoped, tag = 'input window, operand 0, single buffered']
    #allocation3 [shape = 's32[1]{0}', space=sflag, size = 0x4, scoped, tag = 'scoped memory for lstm_classifier_forward.1']
    #allocation4 [shape = 's32[1]{0}', space=sflag, size = 0x4, scoped, tag = 'scoped memory for lstm_classifier_forward.1']
    #allocation5 [shape = 'u8[4096]{0}', space=vmem, size = 0x1000, scoped, tag = 'input window, operand 1, single buffered']
    #allocation6 [shape = 's32[1]{0}', space=sflag, size = 0x4, scoped, tag = 'scoped memory for lstm_classifier_forward.1']
    #allocation7 [shape = 'u8[8192]{0}', space=vmem, size = 0x2000, scoped, tag = 'input window, operand 2, single buffered']
    #allocation8 [shape = 'u8[1024]{0}', space=vmem, size = 0x400, scoped, tag = 'input window, operand 3, single buffered']
    #allocation9 [shape = 's32[1]{0}', space=sflag, size = 0x4, scoped, tag = 'scoped memory for lstm_classifier_forward.1']
    #allocation10 [shape = 'u8[8192]{0}', space=vmem, size = 0x2000, scoped, tag = 'input window, operand 4, single buffered']
    #allocation11 [shape = 'u8[1024]{0}', space=vmem, size = 0x400, scoped, tag = 'output window, operand 0, single buffered']
    %11 = vsyncpa [#allocation3], 0
    %12 = vsyncpa [#allocation6], 0
    %13 = vsyncpa [#allocation9], 0
    %14 = vsyncpa [#allocation4], 0
    // Predicated region
    $region2: #{lstm_classifier_forward.1} parent=1 // pred_check
      _
    $region3: #{lstm_classifier_forward.1} parent=1 // pred_check_branch
      %16 = sbr.rel (0) target = $region5
    $region4: #{lstm_classifier_forward.1} parent=1 // pred_region
      %s18 = ssub.s32 32, 32
      %19 = vsyncadd [#allocation3], %s18
      %s21 = sshll.u32 [#allocation2], 4
      %s22 = int_to_ptr.vmem [resolvable:$true] %s21
      %24 = dma.hbm_to_vmem [thread:$0]  %s0, 32, %s22, [#allocation3]
    $region5: #{lstm_classifier_forward.1} parent=1 // pred_fallthru
      _
    // Predicated region
    $region6: #{lstm_classifier_forward.1} parent=1 // pred_check
      _
    $region7: #{lstm_classifier_forward.1} parent=1 // pred_check_branch
      %26 = sbr.rel (0) target = $region9
    $region8: #{lstm_classifier_forward.1} parent=1 // pred_region
      %s28 = ssub.s32 128, 128
      %29 = vsyncadd [#allocation6], %s28
      %s30 = sshll.u32 [#allocation5], 4
      %s31 = int_to_ptr.vmem [resolvable:$true] %s30
      %36 = dma.hbm_to_vmem [thread:$0]  %s1, 128, %s31, [#allocation6], 64, 64, 4
    $region9: #{lstm_classifier_forward.1} parent=1 // pred_fallthru
      _
    // Predicated region
    $region10: #{lstm_classifier_forward.1} parent=1 // pred_check
      _
    $region11: #{lstm_classifier_forward.1} parent=1 // pred_check_branch
      %38 = sbr.rel (0) target = $region13
    $region12: #{lstm_classifier_forward.1} parent=1 // pred_region
      %s40 = ssub.s32 256, 256
      %41 = vsyncadd [#allocation6], %s40
      %s42 = sshll.u32 [#allocation7], 4
      %s43 = int_to_ptr.vmem [resolvable:$true] %s42
      %48 = dma.hbm_to_vmem [thread:$0]  %s2, 256, %s43, [#allocation6], 64, 64, 4
    $region13: #{lstm_classifier_forward.1} parent=1 // pred_fallthru
      _
    // Predicated region
    $region14: #{lstm_classifier_forward.1} parent=1 // pred_check
      _
    $region15: #{lstm_classifier_forward.1} parent=1 // pred_check_branch
      %50 = sbr.rel (0) target = $region17
    $region16: #{lstm_classifier_forward.1} parent=1 // pred_region
      %s52 = ssub.s32 32, 32
      %53 = vsyncadd [#allocation9], %s52
      %s55 = sshll.u32 [#allocation8], 4
      %s56 = int_to_ptr.vmem [resolvable:$true] %s55
      %58 = dma.hbm_to_vmem [thread:$0]  %s3, 32, %s56, [#allocation9]
    $region17: #{lstm_classifier_forward.1} parent=1 // pred_fallthru
      _
    // Predicated region
    $region18: #{lstm_classifier_forward.1} parent=1 // pred_check
      _
    $region19: #{lstm_classifier_forward.1} parent=1 // pred_check_branch
      %60 = sbr.rel (0) target = $region21
    $region20: #{lstm_classifier_forward.1} parent=1 // pred_region
      %s62 = ssub.s32 256, 256
      %63 = vsyncadd [#allocation9], %s62
      %s64 = sshll.u32 [#allocation10], 4
      %s65 = int_to_ptr.vmem [resolvable:$true] %s64
      %70 = dma.hbm_to_vmem [thread:$0]  %s4, 256, %s65, [#allocation9], 64, 64, 4
    $region21: #{lstm_classifier_forward.1} parent=1 // pred_fallthru
      _
    // Predicated region
    $region22: #{lstm_classifier_forward.1} parent=1 // pred_check
      _
    $region23: #{lstm_classifier_forward.1} parent=1 // pred_check_branch
      %72 = sbr.rel (0) target = $region25
    $region24: #{lstm_classifier_forward.1} parent=1 // pred_region
      _
    $region25: #{lstm_classifier_forward.1} parent=1 // pred_fallthru
      _
    // Predicated region
    $region26: #{lstm_classifier_forward.1} parent=1 // pred_check
      _
    $region27: #{lstm_classifier_forward.1} parent=1 // pred_check_branch
      %74 = sbr.rel (0) target = $region29
    $region28: #{lstm_classifier_forward.1} parent=1 // pred_region
      %75 = dma.done [#allocation3], 32
    $region29: #{lstm_classifier_forward.1} parent=1 // pred_fallthru
      _
    // Predicated region
    $region30: #{lstm_classifier_forward.1} parent=1 // pred_check
      _
    $region31: #{lstm_classifier_forward.1} parent=1 // pred_check_branch
      %77 = sbr.rel (0) target = $region33
    $region32: #{lstm_classifier_forward.1} parent=1 // pred_region
      %78 = dma.done [#allocation6], 128
    $region33: #{lstm_classifier_forward.1} parent=1 // pred_fallthru
      _
    // Predicated region
    $region34: #{lstm_classifier_forward.1} parent=1 // pred_check
      _
    $region35: #{lstm_classifier_forward.1} parent=1 // pred_check_branch
      %80 = sbr.rel (0) target = $region37
    $region36: #{lstm_classifier_forward.1} parent=1 // pred_region
      %81 = dma.done [#allocation6], 256
    $region37: #{lstm_classifier_forward.1} parent=1 // pred_fallthru
      _
    // Predicated region
    $region38: #{lstm_classifier_forward.1} parent=1 // pred_check
      _
    $region39: #{lstm_classifier_forward.1} parent=1 // pred_check_branch
      %83 = sbr.rel (0) target = $region41
    $region40: #{lstm_classifier_forward.1} parent=1 // pred_region
      %84 = dma.done [#allocation9], 32
    $region41: #{lstm_classifier_forward.1} parent=1 // pred_fallthru
      _
    // Predicated region
    $region42: #{lstm_classifier_forward.1} parent=1 // pred_check
      _
    $region43: #{lstm_classifier_forward.1} parent=1 // pred_check_branch
      %86 = sbr.rel (0) target = $region45
    $region44: #{lstm_classifier_forward.1} parent=1 // pred_region
      %87 = dma.done [#allocation9], 256
    $region45: #{lstm_classifier_forward.1} parent=1 // pred_fallthru
      _
    %v89 = vld [vmem:[#allocation8] sm:$0x3]
    %v90 = vld [vmem:[#allocation10] sm:$0xf]
    %v91 = vld [vmem:[#allocation10 + $0x4] sm:$0xf]
    %v92 = vld [vmem:[#allocation10 + $0x8] sm:$0xf]
    %v93 = vld [vmem:[#allocation10 + $0xc] sm:$0xf]
    %v94 = vld [vmem:[%s5] sm:$0x1]
    %v95 = vld [vmem:[#allocation2] sm:$0x3]
    %v96 = vld [vmem:[#allocation5] sm:$0xf]
    %v97 = vld [vmem:[#allocation5 + $0x4] sm:$0xf]
    %v98 = vpack.c.bf16 %v95, %v95
    %v99 = vlaneseq
    %v100 = vshrl.u32 %v99, 7
    %v101 = vsub.s32 0, %v100
    %v102 = vrot.slane %v89, %v101
    %v105 = vunpack.c.l.b16 %v96
    %v106 = vunpack.c.l.b16 %v97
    %v107 = vpack.c.b16 %v106, %v105
    %vm109 = vcmask 130048
    %v111 = vsel %vm109, %v98, 0
    %113 = vmatprep.subr.bf16.mxu0 0
    %114 = vmatpush1.bf16.msra.mxu0 0
    %115 = vmatprep.subr.bf16.mxu0 0
    %116 = vmatpush1.bf16.msra.mxu0 0
    %117 = vmatprep.subr.bf16.mxu0 0
    %118 = vmatpush1.bf16.msra.mxu0 0
    %119 = vmatprep.subr.bf16.mxu0 0
    %120 = vmatpush1.bf16.msra.mxu0 0
    %121 = vmatprep.subr.bf16.mxu0 0
    %122 = vmatpush1.bf16.msra.mxu0 0
    %123 = vmatprep.subr.bf16.mxu0 0
    %124 = vmatpush1.bf16.msra.mxu0 0
    %125 = vmatprep.subr.bf16.mxu0 0
    %126 = vmatpush1.bf16.msra.mxu0 0
    %127 = vmatprep.subr.bf16.mxu0 0
    %128 = vmatpush1.bf16.msra.mxu0 %v107
    %129 = vmatprep.subr.bf16.mxu0 0
    %130 = vmatpush2.bf16.msra.mxu0 0
    %131 = vmatprep.subr.bf16.mxu0 0
    %132 = vmatpush2.bf16.msra.mxu0 0
    %133 = vmatprep.subr.bf16.mxu0 0
    %134 = vmatpush2.bf16.msra.mxu0 0
    %135 = vmatprep.subr.bf16.mxu0 0
    %136 = vmatpush2.bf16.msra.mxu0 0
    %137 = vmatprep.subr.bf16.mxu0 0
    %138 = vmatpush2.bf16.msra.mxu0 0
    %139 = vmatprep.subr.bf16.mxu0 0
    %140 = vmatpush2.bf16.msra.mxu0 0
    %141 = vmatprep.subr.bf16.mxu0 0
    %142 = vmatpush2.bf16.msra.mxu0 0
    %143 = vmatprep.subr.bf16.mxu0 0
    %144 = vmatpush2.bf16.msra.mxu0 0
    %145 = vmatprep.mubr.bf16.mxu0 0
    %146 = vmatmul.mubr.bf16.gmra.mxu0 %v111
    %v147 = vpop.f32.mrf.mxu0
    %v148 = vadd.f32 %v102, %v147
    %v149 = vpop.f32.mrf.mxu0
    %v150 = vpop.f32.mrf.mxu0
    %v151 = vpop.f32.mrf.mxu0
    %152 = vdwg.mxu0
    %v153 = vxor.u32 %v148, 2147483648
    %v154 = vmul.f32 %v153, 1.442695
    %v155 = vpow.pop %v154
    %v156 = vadd.f32 %v155, 1.0
    %v157 = vrcp.pop %v156
    %v158 = vmul.f32 1.0, %v157
    %v159 = vtanh.pop %v148
    %161 = vrot.lane.b32.xlu0 %v159, 96
    %v162 = vpop.permute.xlu0 %161
    %v164 = vmul.f32 %v158, %v162
    %v165 = vtanh.pop %v164
    %167 = vrot.lane.b32.xlu0 %v165, 64
    %v168 = vpop.permute.xlu0 %167
    %v170 = vmul.f32 %v158, %v168
    %v171 = vld [vmem:[#allocation7] sm:$0xf]
    %v172 = vld [vmem:[#allocation7 + $0x4] sm:$0xf]
    %v173 = vld [vmem:[#allocation7 + $0x8] sm:$0xf]
    %v174 = vld [vmem:[#allocation7 + $0xc] sm:$0xf]
    %v175 = vpack.c.bf16 %v170, %v170
    %v176 = vlaneseq
    %v177 = vshrl.u32 %v176, 7
    %v178 = vsub.s32 1, %v177
    %v179 = vrot.slane %v89, %v178
    %181 = vrot.lane.b32.xlu0 %v175, 64
    %v182 = vpop.permute.xlu0 %181
    %v187 = vunpack.c.l.b16 %v171
    %v188 = vunpack.c.l.b16 %v172
    %v189 = vunpack.c.l.b16 %v173
    %v190 = vunpack.c.l.b16 %v174
    %v191 = vpack.c.b16 %v188, %v187
    %v192 = vpack.c.b16 %v190, %v189
    %vm195 = vcmask 261120
    %v197 = vsel %vm195, %v182, 0
    %199 = vmatprep.subr.bf16.mxu0 0
    %200 = vmatpush1.bf16.msra.mxu0 0
    %201 = vmatprep.subr.bf16.mxu0 0
    %202 = vmatpush1.bf16.msra.mxu0 0
    %203 = vmatprep.subr.bf16.mxu0 0
    %204 = vmatpush1.bf16.msra.mxu0 0
    %205 = vmatprep.subr.bf16.mxu0 0
    %206 = vmatpush1.bf16.msra.mxu0 0
    %207 = vmatprep.subr.bf16.mxu0 0
    %208 = vmatpush1.bf16.msra.mxu0 0
    %209 = vmatprep.subr.bf16.mxu0 0
    %210 = vmatpush1.bf16.msra.mxu0 0
    %211 = vmatprep.subr.bf16.mxu0 0
    %212 = vmatpush1.bf16.msra.mxu0 %v192
    %213 = vmatprep.subr.bf16.mxu0 0
    %214 = vmatpush1.bf16.msra.mxu0 %v191
    %215 = vmatprep.subr.bf16.mxu0 0
    %216 = vmatpush2.bf16.msra.mxu0 0
    %217 = vmatprep.subr.bf16.mxu0 0
    %218 = vmatpush2.bf16.msra.mxu0 0
    %219 = vmatprep.subr.bf16.mxu0 0
    %220 = vmatpush2.bf16.msra.mxu0 0
    %221 = vmatprep.subr.bf16.mxu0 0
    %222 = vmatpush2.bf16.msra.mxu0 0
    %223 = vmatprep.subr.bf16.mxu0 0
    %224 = vmatpush2.bf16.msra.mxu0 0
    %225 = vmatprep.subr.bf16.mxu0 0
    %226 = vmatpush2.bf16.msra.mxu0 0
    %227 = vmatprep.subr.bf16.mxu0 0
    %228 = vmatpush2.bf16.msra.mxu0 0
    %229 = vmatprep.subr.bf16.mxu0 0
    %230 = vmatpush2.bf16.msra.mxu0 0
    %231 = vmatprep.mubr.bf16.mxu0 0
    %232 = vmatmul.mubr.bf16.gmra.mxu0 %v197
    %v233 = vpop.f32.mrf.mxu0
    %v234 = vadd.f32 %v179, %v233
    %v235 = vpop.f32.mrf.mxu0
    %v236 = vpop.f32.mrf.mxu0
    %v237 = vpop.f32.mrf.mxu0
    %238 = vdwg.mxu0
    %v239 = vxor.u32 %v234, 2147483648
    %v240 = vmul.f32 %v239, 1.442695
    %v241 = vpow.pop %v240
    %v242 = vadd.f32 %v241, 1.0
    %v243 = vrcp.pop %v242
    %v244 = vmul.f32 1.0, %v243
    %v245 = vtanh.pop %v234
    %247 = vrot.lane.b32.xlu0 %v245, 96
    %v248 = vpop.permute.xlu0 %247
    %v250 = vmul.f32 %v244, %v248
    %v251 = vtanh.pop %v250
    %253 = vrot.lane.b32.xlu0 %v251, 64
    %v254 = vpop.permute.xlu0 %253
    %v256 = vmul.f32 %v244, %v254
    %v257 = vpack.c.bf16 %v256, %v256
    %v259 = vlaneseq
    %v260 = vshrl.u32 %v259, 7
    %v261 = vsub.s32 0, %v260
    %v262 = vrot.slane %v94, %v261
    %265 = vrot.lane.b32.xlu0 %v257, 64
    %v266 = vpop.permute.xlu0 %265
    %v271 = vunpack.c.l.b16 %v90
    %v272 = vunpack.c.l.b16 %v91
    %v273 = vunpack.c.l.b16 %v92
    %v274 = vunpack.c.l.b16 %v93
    %v275 = vpack.c.b16 %v272, %v271
    %v276 = vpack.c.b16 %v274, %v273
    %v280 = vsel %vm195, %v266, 0
    %282 = vmatprep.subr.bf16.mxu0 0
    %283 = vmatpush1.bf16.msra.mxu0 0
    %284 = vmatprep.subr.bf16.mxu0 0
    %285 = vmatpush1.bf16.msra.mxu0 0
    %286 = vmatprep.subr.bf16.mxu0 0
    %287 = vmatpush1.bf16.msra.mxu0 0
    %288 = vmatprep.subr.bf16.mxu0 0
    %289 = vmatpush1.bf16.msra.mxu0 0
    %290 = vmatprep.subr.bf16.mxu0 0
    %291 = vmatpush1.bf16.msra.mxu0 0
    %292 = vmatprep.subr.bf16.mxu0 0
    %293 = vmatpush1.bf16.msra.mxu0 0
    %294 = vmatprep.subr.bf16.mxu0 0
    %295 = vmatpush1.bf16.msra.mxu0 %v276
    %296 = vmatprep.subr.bf16.mxu0 0
    %297 = vmatpush1.bf16.msra.mxu0 %v275
    %298 = vmatprep.subr.bf16.mxu0 0
    %299 = vmatpush2.bf16.msra.mxu0 0
    %300 = vmatprep.subr.bf16.mxu0 0
    %301 = vmatpush2.bf16.msra.mxu0 0
    %302 = vmatprep.subr.bf16.mxu0 0
    %303 = vmatpush2.bf16.msra.mxu0 0
    %304 = vmatprep.subr.bf16.mxu0 0
    %305 = vmatpush2.bf16.msra.mxu0 0
    %306 = vmatprep.subr.bf16.mxu0 0
    %307 = vmatpush2.bf16.msra.mxu0 0
    %308 = vmatprep.subr.bf16.mxu0 0
    %309 = vmatpush2.bf16.msra.mxu0 0
    %310 = vmatprep.subr.bf16.mxu0 0
    %311 = vmatpush2.bf16.msra.mxu0 0
    %312 = vmatprep.subr.bf16.mxu0 0
    %313 = vmatpush2.bf16.msra.mxu0 0
    %314 = vmatprep.mubr.bf16.mxu0 0
    %315 = vmatmul.mubr.bf16.gmra.mxu0 %v280
    %v316 = vpop.f32.mrf.mxu0
    %v317 = vadd.f32 %v262, %v316
    %v318 = vpop.f32.mrf.mxu0
    %v319 = vpop.f32.mrf.mxu0
    %v320 = vpop.f32.mrf.mxu0
    %321 = vdwg.mxu0
    %vm322 = vcmask 1041408
    %v323 = vsel %vm322, %v317, -inf
    %324 = vmax.xlane.f32.xlu0 %v323
    %v325 = vpop.xlane.xlu0 %324
    %v326 = vsub.f32 %v317, %v325
    %v327 = vmul.f32 %v326, 1.442695
    %v328 = vpow.pop %v327
    %v329 = vsel %vm322, %v328, 0.0
    %330 = vadd.xlane.f32.xlu0 %v329
    %v331 = vpop.xlane.xlu0 %330
    %v332 = vrcp.pop %v331
    %v333 = vmul.f32 %v328, %v332
    %334 = vst [vmem:[#allocation11] sm:$0x3] %v333
    // Predicated region
    $region46: #{lstm_classifier_forward.1} parent=1 // pred_check
      _
    $region47: #{lstm_classifier_forward.1} parent=1 // pred_check_branch
      %336 = sbr.rel (0) target = $region49
    $region48: #{lstm_classifier_forward.1} parent=1 // pred_region
      %s338 = ssub.s32 32, 32
      %339 = vsyncadd [#allocation4], %s338
      %s341 = sshll.u32 [#allocation11], 4
      %s342 = int_to_ptr.vmem [resolvable:$true] %s341
      %344 = dma.vmem_to_hbm [thread:$0]  %s342, 32, %s6, [#allocation4]
    $region49: #{lstm_classifier_forward.1} parent=1 // pred_fallthru
      _
    // Predicated region
    $region50: #{lstm_classifier_forward.1} parent=1 // pred_check
      _
    $region51: #{lstm_classifier_forward.1} parent=1 // pred_check_branch
      %346 = sbr.rel (0) target = $region53
    $region52: #{lstm_classifier_forward.1} parent=1 // pred_region
      %347 = dma.done [#allocation4], 32
    $region53: #{lstm_classifier_forward.1} parent=1 // pred_fallthru
      _
    %348 = vsyncpa [#allocation3], 1
    %349 = vsyncpa [#allocation6], 1
    %350 = vsyncpa [#allocation9], 1
    %351 = vsyncpa [#allocation4], 1

</llo_original>
